<compile_context>
chip_gen: v7x
topology: tpu7x:2x2x1
jax: 0.10.0
libtpu: 0.0.40
codegen_flags: <defaults>
</compile_context>

<pallas_src>
import jax
import jax.numpy as jnp
from jax.experimental import pallas as pl
from jax.experimental.pallas import tpu as pltpu

_LANE = 512  # lane-dense last dim (multiple of 128)


def _tied_module_kernel(x_ref, w_ref, b_ref, buf_ref, o_ref):
    # Scalar params live in SMEM; folding the tied bias/buffer rides free scalar-ALU slots.
    w = w_ref[0]
    c = 2.0 * (b_ref[0] + buf_ref[0])          # bias + tied_bias + buffer + tied_buffer
    x = x_ref[...].astype(jnp.float32)         # f32 in-register compute (no-op if f32)
    o_ref[...] = (x * w + c).astype(o_ref.dtype)


def _is_v5e() -> bool:
    try:
        kind = jax.devices()[0].device_kind.lower()
    except Exception:
        return False
    return ("v5 lite" in kind) or ("v5e" in kind) or ("v5litepod" in kind)


def mock_tied_module_forward(x, weight, bias, buffer):
    """MockTiedModule.forward.  x: (..., 1); weight: (1, 1); bias: (1,); buffer: (1,)."""
    orig_shape = x.shape
    assert orig_shape[-1] == 1, "Linear(1, 1) expects feature dim of size 1"
    n = x.size
    out_dtype = x.dtype

    # Scalars stay f32 in SMEM (32-bit scalar path) regardless of activation dtype.
    w_s = weight.reshape((1,)).astype(jnp.float32)
    b_s = bias.reshape((1,)).astype(jnp.float32)
    buf_s = buffer.reshape((1,)).astype(jnp.float32)

    # Lane-dense slab: view the N scalars as (rows, _LANE).
    rows = pl.cdiv(n, _LANE)
    total = rows * _LANE
    ragged = total != n

    x_flat = x.reshape(-1)
    if ragged:
        # Pad only to the next lane multiple; allow_input_fusion lets XLA fuse this
        # producer into the pallas_call input instead of an extra HBM pass.
        x_flat = jnp.pad(x_flat, (0, total - n))
    x2d = x_flat.reshape(rows, _LANE)

    # Per-generation tile sizing: ~4 MiB tiles (v6e/v7x), 2 MiB on v5e.
    itemsize = jnp.dtype(out_dtype).itemsize
    tile_bytes = (2 << 20) if _is_v5e() else (4 << 20)
    max_tile_rows = max(8, (tile_bytes // (_LANE * itemsize)) // 8 * 8)

    if rows <= max_tile_rows:
        tile_rows = rows                      # single full-extent block, grid = (1,)
    else:
        tile_rows = max_tile_rows             # multiple of 8; last block may be partial
    grid = (pl.cdiv(rows, tile_rows),)

    out2d = pl.pallas_call(
        _tied_module_kernel,
        out_shape=jax.ShapeDtypeStruct((rows, _LANE), out_dtype),
        grid=grid,
        in_specs=[
            pl.BlockSpec((tile_rows, _LANE), lambda i: (i, 0)),  # x tile, auto-pipelined
            pl.BlockSpec(memory_space=pltpu.SMEM),               # weight scalar
            pl.BlockSpec(memory_space=pltpu.SMEM),               # bias scalar (tied)
            pl.BlockSpec(memory_space=pltpu.SMEM),               # buffer scalar (tied)
        ],
        out_specs=pl.BlockSpec((tile_rows, _LANE), lambda i: (i, 0)),
        compiler_params=pltpu.CompilerParams(
            dimension_semantics=("parallel",),
            vmem_limit_bytes=40 * 1024 * 1024,
            allow_input_fusion=([True, False, False, False] if ragged else None),
        ),
    )(x2d, w_s, b_s, buf_s)

    if ragged:
        return out2d.reshape(-1)[:n].reshape(orig_shape)
    return out2d.reshape(orig_shape)


if __name__ == "__main__":
    key = jax.random.PRNGKey(0)
    kx, kw, kb, kx2 = jax.random.split(key, 4)

    # Deterministic parameter init (synthetic, not a checkpoint load).
    weight = jax.random.normal(kw, (1, 1), dtype=jnp.float32) * 0.5
    bias = jax.random.normal(kb, (1,), dtype=jnp.float32) * 0.1
    buffer = jnp.ones((1,), dtype=jnp.float32)   # register_buffer('buffer', ones(1))

    # Ragged path: tiny batch of 8 rows, feature dim 1 (as the PyTorch test uses).
    x_small = jax.random.normal(kx, (8, 1), dtype=jnp.float32)
    out_small = jax.block_until_ready(mock_tied_module_forward(x_small, weight, bias, buffer))
    ref_small = x_small @ weight.T + bias + bias + buffer + buffer
    assert out_small.shape == x_small.shape and out_small.dtype == x_small.dtype
    assert jnp.allclose(out_small, ref_small, atol=1e-6, rtol=1e-6), (out_small, ref_small)

    # Aligned fast path: N multiple of 512 -> no pad, no slice.
    x_big = jax.random.normal(kx2, (1024, 1), dtype=jnp.float32)
    out_big = jax.block_until_ready(mock_tied_module_forward(x_big, weight, bias, buffer))
    ref_big = x_big @ weight.T + bias + bias + buffer + buffer
    assert out_big.shape == x_big.shape and out_big.dtype == x_big.dtype
    assert jnp.allclose(out_big, ref_big, atol=1e-6, rtol=1e-6), (out_big, ref_big)

    print("KERNEL_OK")
</pallas_src>

<mosaic_0001>
module attributes {stable_mosaic.version = 11 : i64} {
  func.func @_tied_module_kernel(%arg0: i32, %arg1: memref<1x512xf32, #tpu.memory_space<vmem>>, %arg2: memref<1xf32, #tpu.memory_space<smem>>, %arg3: memref<1xf32, #tpu.memory_space<smem>>, %arg4: memref<1xf32, #tpu.memory_space<smem>>, %arg5: memref<1x512xf32, #tpu.memory_space<vmem>>) attributes {dimension_semantics = [#tpu.dimension_semantics<parallel>], iteration_bounds = array<i64: 1>, scalar_prefetch = 0 : i64, scratch_operands = 0 : i64, tpu.core_type = #tpu.core_type<tc>, window_params = [{transform_indices = @transform_0, window_bounds = array<i64: 1, 512>}, {transform_indices = @transform_1, window_bounds = array<i64: 1>}, {transform_indices = @transform_2, window_bounds = array<i64: 1>}, {transform_indices = @transform_3, window_bounds = array<i64: 1>}, {transform_indices = @transform_4, window_bounds = array<i64: 1, 512>}]} {
    %c0 = arith.constant 0 : index
    %0 = memref.load %arg2[%c0] : memref<1xf32, #tpu.memory_space<smem>>
    %c0_0 = arith.constant 0 : index
    %1 = memref.load %arg3[%c0_0] : memref<1xf32, #tpu.memory_space<smem>>
    %c0_1 = arith.constant 0 : index
    %2 = memref.load %arg4[%c0_1] : memref<1xf32, #tpu.memory_space<smem>>
    %3 = arith.addf %1, %2 : f32
    %cst = arith.constant 2.000000e+00 : f32
    %4 = arith.mulf %cst, %3 : f32
    %c0_2 = arith.constant 0 : index
    %c0_3 = arith.constant 0 : index
    %5 = vector.load %arg1[%c0_2, %c0_3] : memref<1x512xf32, #tpu.memory_space<vmem>>, vector<1x512xf32>
    %6 = vector.broadcast %0 : f32 to vector<1x512xf32>
    %7 = arith.mulf %5, %6 : vector<1x512xf32>
    %8 = vector.broadcast %4 : f32 to vector<1x512xf32>
    %9 = arith.addf %7, %8 : vector<1x512xf32>
    %c0_4 = arith.constant 0 : index
    %c0_5 = arith.constant 0 : index
    %10 = vector.load %arg5[%c0_4, %c0_5] : memref<1x512xf32, #tpu.memory_space<vmem>>, vector<1x512xf32>
    tpu.vector_store %arg5[%c0_4, %c0_5], %9 {strides = array<i32>} : memref<1x512xf32, #tpu.memory_space<vmem>>, vector<1x512xf32>,
    return
  }
  func.func @transform_0(%arg0: i32) -> (i32, i32) {
    %c0_i32 = arith.constant 0 : i32
    %c0_i32_0 = arith.constant 0 : i32
    return %arg0, %c0_i32 : i32, i32
  }
  func.func @transform_1(%arg0: i32) -> i32 {
    %c0_i32 = arith.constant 0 : i32
    %c0_i32_0 = arith.constant 0 : i32
    return %c0_i32 : i32
  }
  func.func @transform_2(%arg0: i32) -> i32 {
    %c0_i32 = arith.constant 0 : i32
    %c0_i32_0 = arith.constant 0 : i32
    return %c0_i32 : i32
  }
  func.func @transform_3(%arg0: i32) -> i32 {
    %c0_i32 = arith.constant 0 : i32
    %c0_i32_0 = arith.constant 0 : i32
    return %c0_i32 : i32
  }
  func.func @transform_4(%arg0: i32) -> (i32, i32) {
    %c0_i32 = arith.constant 0 : i32
    %c0_i32_0 = arith.constant 0 : i32
    return %arg0, %c0_i32 : i32, i32
  }
}

</mosaic_0001>

<llo_original>
// kernel: tpu_custom_call.1
$region0: #{tpu_custom_call.1}
  #allocation0 [shape = 'u32[]', space=smem, size = 0x4, offset = 0x4, fixed_abs, tag = 'smem constant byte address 0x4 - core index']
  #allocation1 [shape = 'u32[144,128]{1,0:T(1,128)}', space=vmem, size = 0x12000, scoped, tag = 'internal scratch']
  #allocation2 [shape = 'f32[1]{0:T(128)S(6)}', space=smem, size = 0x200, scoped, tag = 'scoped memory for tpu_custom_call.1']
  #allocation3 [shape = 'f32[1]{0:T(128)S(6)}', space=smem, size = 0x200, scoped, tag = 'scoped memory for tpu_custom_call.1']
  #allocation4 [shape = 'f32[1]{0:T(128)S(6)}', space=smem, size = 0x200, scoped, tag = 'scoped memory for tpu_custom_call.1']
  %s0 = inlined_call_operand.vmem [shape: f32[1,512], index: 0, kind: input, shape index: {}]
  %s1 = inlined_call_operand.<no memory space> [shape: f32[1], index: 1, kind: input, shape index: {}]
  %s2 = inlined_call_operand.<no memory space> [shape: f32[1], index: 2, kind: input, shape index: {}]
  %s3 = inlined_call_operand.<no memory space> [shape: f32[1], index: 3, kind: input, shape index: {}]
  %s4 = inlined_call_operand.hbm [shape: f32[1,512], index: 4, kind: output, shape index: {}]
  %s5 = sld [smem:[#allocation0]]
  $region26: #{tpu_custom_call.1} parent=0
    _
  %s7 = ssub.s32 1, %s5
  %s8 = scalar_select 0, %s7, %s5
  %9 = sst [smem:[#allocation2]] %s1
  %10 = sst [smem:[#allocation3]] %s2
  %11 = sst [smem:[#allocation4]] %s3
  $region1: #{tpu_custom_call.1} parent=0
    #allocation5 [shape = 'u8[2048]{0}', space=vmem, size = 0x800, scoped, tag = 'output window, operand 0, single buffered']
    #allocation6 [shape = 's32[1]{0}', space=sflag, size = 0x4, scoped, tag = 'scoped memory for tpu_custom_call.1']
    %12 = vsyncpa [#allocation6], 0
    // Predicated region
    $region2: #{tpu_custom_call.1} parent=1 // pred_check
      _
    $region3: #{tpu_custom_call.1} parent=1 // pred_check_branch
      %14 = sbr.rel (0) target = $region5
    $region4: #{tpu_custom_call.1} parent=1 // pred_region
      _
    $region5: #{tpu_custom_call.1} parent=1 // pred_fallthru
      _
    // Predicated region
    $region6: #{tpu_custom_call.1} parent=1 // pred_check
      _
    $region7: #{tpu_custom_call.1} parent=1 // pred_check_branch
      %16 = sbr.rel (0) target = $region9
    $region8: #{tpu_custom_call.1} parent=1 // pred_region
      _
    $region9: #{tpu_custom_call.1} parent=1 // pred_fallthru
      _
    // Predicated region
    $region10: #{tpu_custom_call.1} parent=1 // pred_check
      _
    $region11: #{tpu_custom_call.1} parent=1 // pred_check_branch
      %18 = sbr.rel (0) target = $region13
    $region12: #{tpu_custom_call.1} parent=1 // pred_region
      _
    $region13: #{tpu_custom_call.1} parent=1 // pred_fallthru
      _
    // Predicated region
    $region14: #{tpu_custom_call.1} parent=1 // pred_check
      _
    $region15: #{tpu_custom_call.1} parent=1 // pred_check_branch
      %20 = sbr.rel (0) target = $region17
    $region16: #{tpu_custom_call.1} parent=1 // pred_region
      _
    $region17: #{tpu_custom_call.1} parent=1 // pred_fallthru
      _
    %s21 = sld [smem:[#allocation2]]
    %s22 = sld [smem:[#allocation3]]
    %s23 = sld [smem:[#allocation4]]
    %s24 = sadd.f32 %s22, %s23
    %s25 = smul.f32 %s24, 2.0
    %v26 = vld [vmem:[%s0] sm:$0xf]
    %v27 = vstv %s21
    %v28 = vmul.f32 %v26, %v27
    %v29 = vstv %s25
    %v30 = vadd.f32 %v28, %v29
    %v31 = vlaneseq
    %vm32 = vcmp.ge.s32.totalorder %v31, 0
    %vm33 = vcmp.lt.s32.totalorder %v31, 512
    %vm34 = vmand %vm32, %vm33
    %35 = vst.msk [vmem:[#allocation5] sm:$0xf] %vm34, %v30
    // Predicated region
    $region18: #{tpu_custom_call.1} parent=1 // pred_check
      _
    $region19: #{tpu_custom_call.1} parent=1 // pred_check_branch
      %37 = sbr.rel (0) target = $region21
    $region20: #{tpu_custom_call.1} parent=1 // pred_region
      %s39 = ssub.s32 64, 64
      %40 = vsyncadd [#allocation6], %s39
      %s42 = sshll.u32 [#allocation5], 4
      %s43 = int_to_ptr.vmem [resolvable:$true] %s42
      %45 = dma.vmem_to_hbm [thread:$0]  %s43, 64, %s4, [#allocation6]
    $region21: #{tpu_custom_call.1} parent=1 // pred_fallthru
      _
    // Predicated region
    $region22: #{tpu_custom_call.1} parent=1 // pred_check
      _
    $region23: #{tpu_custom_call.1} parent=1 // pred_check_branch
      %47 = sbr.rel (0) target = $region25
    $region24: #{tpu_custom_call.1} parent=1 // pred_region
      %48 = dma.done [#allocation6], 64
    $region25: #{tpu_custom_call.1} parent=1 // pred_fallthru
      _
    %49 = vsyncpa [#allocation6], 1

</llo_original>
